<compile_context>
chip_gen: v7x
topology: tpu7x:2x2x1
jax: 0.10.0
libtpu: 0.0.40
codegen_flags: <defaults>
</compile_context>

<pallas_src>
import math
from functools import partial

import numpy as np
import jax
import jax.numpy as jnp
from jax.experimental import pallas as pl
from jax.experimental.pallas import tpu as pltpu


def _time_embed_kernel(t_ref, out_ref, *, pack: int, dim: int, half: int, scale: float):
    # t_ref:   (TB, pack) f32  — `pack` consecutive timesteps per output row.
    # out_ref: (TB, pack*dim) f32.
    # In-kernel frequency / phase tables: iota + where on the VPU, exp on the
    # EUP (otherwise-idle slot); no HBM traffic for them.
    ci = jax.lax.broadcasted_iota(jnp.int32, (1, dim), 1)             # column in [0, dim)
    is_cos = ci >= half
    fidx = jnp.where(is_cos, ci - half, ci).astype(jnp.float32)       # freq index in [0, half)
    freq = jnp.exp(fidx * jnp.float32(scale))                         # (1, dim)
    phase = jnp.where(is_cos, jnp.float32(math.pi / 2.0), jnp.float32(0.0))  # (1, dim)

    t = t_ref[...]                                                    # (TB, pack)
    # Each packed element j broadcasts its timestep over its dim-wide row chunk.
    pieces = [t[:, j:j + 1] * freq + phase for j in range(pack)]      # each (TB, dim)
    arg = pieces[0] if pack == 1 else jnp.concatenate(pieces, axis=-1)  # (TB, pack*dim)
    # Single full-lane-width transcendental pass: cos(x) == sin(x + pi/2).
    out_ref[...] = jnp.sin(arg)


def _round_up(x: int, m: int) -> int:
    return ((x + m - 1) // m) * m


def _pick_block_rows(n_rows: int, width_elems: int) -> int:
    """Rows per block: ~2 MiB output blocks, VMEM-bounded, multiple of 8, >=2 grid steps."""
    if n_rows <= 8:
        return n_rows                                # block == full array dim (tiling rule OK)
    row_bytes = max(width_elems, 128) * 4            # VMEM rows are lane-padded to >=128
    target_rows = max(8, (2 * 1024 * 1024) // row_bytes)
    # ~6 live block-sized buffers (in/out double-buffered + f32 temps) under ~12 MiB,
    # safely inside v5e's 16 MiB default scope and v7x's 64 MiB physical VMEM.
    budget_rows = max(8, (12 * 1024 * 1024) // (6 * row_bytes))
    tb = min(n_rows, target_rows, budget_rows)
    # Guarantee >=2 grid steps so the "parallel" axis can use both v7x TensorCores.
    tb = min(tb, _round_up(pl.cdiv(n_rows, 2), 8))
    tb = max(8, (tb // 8) * 8)
    return tb


def time_position_embedding(t: jax.Array, embedding_size: int) -> jax.Array:
    """t: (B,) float/int timesteps -> (B, embedding_size) f32 sinusoidal embedding."""
    assert embedding_size % 2 == 0, "embedding_size must be even (torch.cat semantics)"
    half = embedding_size // 2
    assert half >= 2, "embedding_size must be >= 4 (PyTorch divides by half-1)"
    dim = embedding_size
    scale = -math.log(10000.0) / (half - 1)

    B = t.shape[0]
    t_f32 = t.astype(jnp.float32)

    # Row packing: fold P = 128 // dim batch rows into one 128-lane output row when
    # possible -> unmasked full-lane stores and no 2x lane-padded output writeback.
    if dim < 128 and 128 % dim == 0 and B % (128 // dim) == 0:
        pack = 128 // dim
    else:
        pack = 1
    width = pack * dim
    rows = B // pack
    t_in = t_f32.reshape(rows, pack)                 # contiguous reshape: layout plumbing only

    tb = _pick_block_rows(rows, width)
    grid = (pl.cdiv(rows, tb),)

    kernel = partial(_time_embed_kernel, pack=pack, dim=dim, half=half, scale=scale)

    out_packed = pl.pallas_call(
        kernel,
        out_shape=jax.ShapeDtypeStruct((rows, width), jnp.float32),
        grid=grid,
        in_specs=[pl.BlockSpec((tb, pack), lambda i: (i, 0))],
        out_specs=pl.BlockSpec((tb, width), lambda i: (i, 0)),
        compiler_params=pltpu.CompilerParams(
            dimension_semantics=("parallel",),
            vmem_limit_bytes=32 * 1024 * 1024,
        ),
    )(t_in)

    # Row-major data is identical; under jit this reshape fuses with the consumer.
    return out_packed.reshape(B, dim)


def _reference_np(t, embedding_size: int) -> np.ndarray:
    """Float64 NumPy reference (PyTorch forward semantics)."""
    t64 = np.asarray(t, dtype=np.float64).reshape(-1, 1)
    half = embedding_size // 2
    he = np.exp(np.arange(half, dtype=np.float64) * (-math.log(10000.0) / (half - 1)))
    arg = t64 * he.reshape(1, -1)
    return np.concatenate([np.sin(arg), np.cos(arg)], axis=-1)


def _check(out, t, embedding_size, tag):
    ref = _reference_np(np.asarray(t), embedding_size)
    err = np.max(np.abs(np.asarray(out, dtype=np.float64) - ref))
    # f32 evaluation of sin/cos at |arg| up to ~1e3 carries ~1e-4 intrinsic error
    # (ulp(1e3) ~ 6e-5 in the argument alone), so use an absolute 2e-3 bound.
    assert out.shape == ref.shape, (tag, out.shape, ref.shape)
    assert err < 2e-3, f"{tag}: max abs error {err} vs float64 reference"


if __name__ == "__main__":
    # Small shipped shape: B=8 diffusion timesteps, embedding_size=64.
    key = jax.random.PRNGKey(0)
    B, embedding_size = 8, 64
    t = jax.random.randint(key, (B,), 0, 1000).astype(jnp.float32)
    out = jax.block_until_ready(time_position_embedding(t, embedding_size))
    _check(out, t, embedding_size, "small/packed")

    # Larger batch, not a multiple of the block rows: exercises the packed
    # 128-lane path, a multi-step grid, and the masked last-tile writeback.
    B2 = 2072
    t2 = jax.random.randint(jax.random.PRNGKey(1), (B2,), 0, 1000).astype(jnp.float32)
    out2 = jax.block_until_ready(time_position_embedding(t2, embedding_size))
    _check(out2, t2, embedding_size, "large/packed")

    # Fallback (unpacked) path: embedding_size >= 128, already lane-aligned.
    B3, D3 = 40, 256
    t3 = jax.random.randint(jax.random.PRNGKey(2), (B3,), 0, 1000).astype(jnp.float32)
    out3 = jax.block_until_ready(time_position_embedding(t3, D3))
    _check(out3, t3, D3, "wide/unpacked")

    print("KERNEL_OK")
</pallas_src>

<mosaic_0001>
module attributes {stable_mosaic.version = 11 : i64} {
  func.func @_time_embed_kernel(%arg0: i32, %arg1: memref<4x2xf32, #tpu.memory_space<vmem>>, %arg2: memref<4x128xf32, #tpu.memory_space<vmem>>) attributes {dimension_semantics = [#tpu.dimension_semantics<parallel>], iteration_bounds = array<i64: 1>, scalar_prefetch = 0 : i64, scratch_operands = 0 : i64, tpu.core_type = #tpu.core_type<tc>, window_params = [{transform_indices = @transform_0, window_bounds = array<i64: 4, 2>}, {transform_indices = @transform_1, window_bounds = array<i64: 4, 128>}]} {
    %0 = tpu.iota {dimensions = array<i32: 1>} : vector<1x64xi32>
    %c32_i32 = arith.constant 32 : i32
    %1 = vector.broadcast %c32_i32 : i32 to vector<1x64xi32>
    %2 = arith.cmpi sge, %0, %1 : vector<1x64xi32>
    %c32_i32_0 = arith.constant 32 : i32
    %3 = vector.broadcast %c32_i32_0 : i32 to vector<1x64xi32>
    %4 = arith.subi %0, %3 : vector<1x64xi32>
    %5 = arith.select %2, %4, %0 : vector<1x64xi1>, vector<1x64xi32>
    %6 = arith.sitofp %5 : vector<1x64xi32> to vector<1x64xf32>
    %cst = arith.constant -0.297107756 : f32
    %7 = vector.broadcast %cst : f32 to vector<1x64xf32>
    %8 = arith.mulf %6, %7 : vector<1x64xf32>
    %9 = math.exp %8 : vector<1x64xf32>
    %cst_1 = arith.constant 1.57079637 : f32
    %cst_2 = arith.constant 0.000000e+00 : f32
    %10 = vector.broadcast %cst_1 : f32 to vector<1x64xf32>
    %11 = vector.broadcast %cst_2 : f32 to vector<1x64xf32>
    %12 = arith.select %2, %10, %11 : vector<1x64xi1>, vector<1x64xf32>
    %c0 = arith.constant 0 : index
    %c0_3 = arith.constant 0 : index
    %13 = vector.load %arg1[%c0, %c0_3] : memref<4x2xf32, #tpu.memory_space<vmem>>, vector<4x2xf32>
    %14 = vector.extract_strided_slice %13 {offsets = [0, 0], sizes = [4, 1], strides = [1, 1]} : vector<4x2xf32> to vector<4x1xf32>
    %15 = vector.broadcast %14 : vector<4x1xf32> to vector<4x64xf32>
    %16 = vector.broadcast %9 : vector<1x64xf32> to vector<4x64xf32>
    %17 = arith.mulf %15, %16 : vector<4x64xf32>
    %18 = vector.broadcast %12 : vector<1x64xf32> to vector<4x64xf32>
    %19 = arith.addf %17, %18 : vector<4x64xf32>
    %20 = vector.extract_strided_slice %13 {offsets = [0, 1], sizes = [4, 1], strides = [1, 1]} : vector<4x2xf32> to vector<4x1xf32>
    %21 = vector.broadcast %20 : vector<4x1xf32> to vector<4x64xf32>
    %22 = vector.broadcast %9 : vector<1x64xf32> to vector<4x64xf32>
    %23 = arith.mulf %21, %22 : vector<4x64xf32>
    %24 = vector.broadcast %12 : vector<1x64xf32> to vector<4x64xf32>
    %25 = arith.addf %23, %24 : vector<4x64xf32>
    %26 = tpu.concatenate %19, %25 in 1 : vector<4x64xf32>, vector<4x64xf32> -> vector<4x128xf32>
    %27 = math.sin %26 : vector<4x128xf32>
    %c0_4 = arith.constant 0 : index
    %c0_5 = arith.constant 0 : index
    %28 = vector.load %arg2[%c0_4, %c0_5] : memref<4x128xf32, #tpu.memory_space<vmem>>, vector<4x128xf32>
    tpu.vector_store %arg2[%c0_4, %c0_5], %27 {strides = array<i32>} : memref<4x128xf32, #tpu.memory_space<vmem>>, vector<4x128xf32>,
    return
  }
  func.func @transform_0(%arg0: i32) -> (i32, i32) {
    %c0_i32 = arith.constant 0 : i32
    %c0_i32_0 = arith.constant 0 : i32
    return %arg0, %c0_i32 : i32, i32
  }
  func.func @transform_1(%arg0: i32) -> (i32, i32) {
    %c0_i32 = arith.constant 0 : i32
    %c0_i32_0 = arith.constant 0 : i32
    return %arg0, %c0_i32 : i32, i32
  }
}

</mosaic_0001>

<llo_original>
// kernel: tpu_custom_call.1
$region0: #{tpu_custom_call.1}
  #allocation0 [shape = 'u32[]', space=smem, size = 0x4, offset = 0x4, fixed_abs, tag = 'smem constant byte address 0x4 - core index']
  #allocation1 [shape = 'u32[144,128]{1,0:T(1,128)}', space=vmem, size = 0x12000, scoped, tag = 'internal scratch']
  %s0 = inlined_call_operand.vmem [shape: f32[4,2], index: 0, kind: input, shape index: {}]
  %s1 = inlined_call_operand.hbm [shape: f32[4,128], index: 1, kind: output, shape index: {}]
  %s2 = sld [smem:[#allocation0]]
  $region14: #{tpu_custom_call.1} parent=0
    _
  %s4 = ssub.s32 1, %s2
  %s5 = scalar_select 0, %s4, %s2
  $region1: #{tpu_custom_call.1} parent=0
    #allocation2 [shape = 'u8[2048]{0}', space=vmem, size = 0x800, scoped, tag = 'output window, operand 0, single buffered']
    #allocation3 [shape = 's32[1]{0}', space=sflag, size = 0x4, scoped, tag = 'scoped memory for tpu_custom_call.1']
    %6 = vsyncpa [#allocation3], 0
    // Predicated region
    $region2: #{tpu_custom_call.1} parent=1 // pred_check
      _
    $region3: #{tpu_custom_call.1} parent=1 // pred_check_branch
      %8 = sbr.rel (0) target = $region5
    $region4: #{tpu_custom_call.1} parent=1 // pred_region
      _
    $region5: #{tpu_custom_call.1} parent=1 // pred_fallthru
      _
    %v9 = vlaneseq
    %v10 = vand.u32 %v9, 127
    %vm11 = vcmp.ge.s32.totalorder %v10, 32
    %v12 = vsub.s32 %v10, 32
    %v13 = vsel %vm11, %v12, %v10
    %v14 = vcvt.s32.f32 %v13
    %v15 = vmul.f32 %v14, -0.29710776
    %v16 = vmul.f32 %v15, 1.442695
    %v17 = vpow.pop %v16
    %v18 = vsel %vm11, 1.5707964, 0.0
    %v19 = vld [vmem:[%s0] sm:$0xf]
    %21 = vset.pattern.permute.xlu0 0
    %22 = vperm.xlu0 %21, %v19
    %v23 = vpop.permute.xlu0 %22
    %v25 = vmul.f32 %v23, %v17
    %v26 = vadd.f32 %v25, %v18
    %27 = vset.pattern.permute.xlu0 1
    %28 = vperm.xlu0 %27, %v19
    %v29 = vpop.permute.xlu0 %28
    %v31 = vmul.f32 %v29, %v17
    %v32 = vadd.f32 %v31, %v18
    %34 = vrot.lane.b32.xlu0 %v32, 64
    %v35 = vpop.permute.xlu0 %34
    %vm37 = vcmask 523264
    %v38 = vsel %vm37, %v26, %v35
    %v39 = vand.u32 2147483647, %v38
    %vm40 = vcmp.le.f32.partialorder %v39, 0.7853982
    %vm41 = vcmp.lt.s32.totalorder %v38, 0
    %v42 = vand.u32 %v38, 2139095040
    %v43 = vshrl.u32 %v42, 23
    %v44 = vsub.s32 %v43, 127
    %v45 = vand.u32 2147483647, %v38
    %v46 = vand.u32 %v45, 8388607
    %v47 = vor.u32 %v46, 8388608
    %v48 = vsub.s32 0, %v47
    %v49 = vadd.s32 %v44, 1
    %vm50 = vcmp.gt.s32.totalorder %v49, 0
    %v51 = vsel %vm50, %v49, 0
    %v52 = vshrl.u32 %v51, 5
    %v53 = vand.u32 %v51, 31
    %v54 = vsub.s32 32, %v53
    %v55 = vshrl.u32 683565275, %v54
    %v56 = vshll.u32 683565275, %v53
    %v57 = vshrl.u32 2475754826, %v54
    %v58 = vor.u32 %v56, %v57
    %v59 = vshll.u32 2475754826, %v53
    %v60 = vshrl.u32 2131351028, %v54
    %v61 = vor.u32 %v59, %v60
    %v62 = vshll.u32 2131351028, %v53
    %v63 = vshrl.u32 2102212464, %v54
    %v64 = vor.u32 %v62, %v63
    %v65 = vshll.u32 2102212464, %v53
    %v66 = vshrl.u32 920167782, %v54
    %v67 = vor.u32 %v65, %v66
    %v68 = vshll.u32 920167782, %v53
    %v69 = vshrl.u32 1326507024, %v54
    %v70 = vor.u32 %v68, %v69
    %vm71 = vcmp.lt.s32.totalorder %v52, 1
    %vm72 = vcmp.lt.s32.totalorder %v52, 2
    %vm73 = vcmp.lt.s32.totalorder %v52, 3
    %vm74 = vcmp.lt.s32.totalorder %v52, 4
    %v75 = vsel %vm71, %v55, %v58
    %v76 = vsel %vm74, %v64, 2102212464
    %v77 = vsel %vm73, %v61, %v76
    %v78 = vsel %vm72, %v75, %v77
    %v79 = vsel %vm71, %v58, %v61
    %v80 = vsel %vm74, %v67, 920167782
    %v81 = vsel %vm73, %v64, %v80
    %v82 = vsel %vm72, %v79, %v81
    %v83 = vsel %vm71, %v61, %v64
    %v84 = vsel %vm74, %v70, 1326507024
    %v85 = vsel %vm73, %v67, %v84
    %v86 = vsel %vm72, %v83, %v85
    %v87 = vshll.u32 %v47, 8
    %v88 = vmul.u32.u64.compose %v87, %v86
    %v89 = vextract.low.u32 %v88
    %v90 = vextract.high.u32 %v88
    %v91 = vmul.u32.u64.compose %v87, %v82
    %v92 = vextract.low.u32 %v91
    %v93 = vextract.high.u32 %v91
    %v94 = vmul.u32 %v87, %v78
    %v95 = vadd.s32 %v90, %v92
    %vm96 = vc.u32 %v90, %v92
    %v97 = vadd.s32 %v93, 1
    %v98 = vsel %vm96, %v97, %v93
    %v99 = vadd.s32 %v94, %v98
    %v100 = vadd.s32 %v99, 536870912
    %v101 = vshrl.u32 %v100, 30
    %v102 = vshll.u32 %v101, 30
    %v103 = vsub.s32 %v99, %v102
    %vm104 = vcmp.lt.s32.totalorder %v103, 0
    %v105 = vsub.s32 0, %v103
    %v106 = vsel %vm104, %v105, %v103
    %v107 = vclz %v106
    %v108 = vsub.s32 %v107, 2
    %vm109 = vcmp.gt.s32.totalorder 0, %v108
    %v110 = vsel %vm109, 0, %v108
    %v111 = vsub.s32 32, %v110
    %v112 = vshll.u32 %v103, %v110
    %v113 = vshrl.u32 %v95, %v111
    %v114 = vor.u32 %v112, %v113
    %v115 = vsub.s32 4294967266, %v110
    %v116 = vadd.s32 %v115, 127
    %v117 = vshll.u32 %v116, 23
    %v118 = vor.u32 4788187, %v117
    %v119 = vand.u32 2147483647, %v118
    %v121 = vcvt.s32.f32 %v114
    %v122 = vmul.f32 %v121, %v119
    %v123 = vxor.u32 %v122, 2147483648
    %v124 = vsel %vm41, %v123, %v122
    %v125 = vsub.s32 4, %v101
    %v126 = vsel %vm41, %v125, %v101
    %v127 = vsel %vm40, %v38, %v124
    %v128 = vsel %vm40, 0, %v126
    %v129 = vcosq.f32.pop %v127
    %v130 = vsinq.f32.pop %v127
    %vm131 = vweird.f32 %v38
    %v132 = vadd.s32 %v128, 3
    %v133 = vand.u32 %v132, 3
    %vm134 = vcmp.lt.s32.totalorder %v133, 2
    %vm135 = vcmp.eq.s32.totalorder %v133, 0
    %v136 = vxor.u32 %v130, 2147483648
    %v137 = vsel %vm135, %v129, %v136
    %vm138 = vcmp.eq.s32.totalorder %v133, 2
    %v139 = vxor.u32 %v129, 2147483648
    %v140 = vsel %vm138, %v139, %v130
    %v141 = vsel %vm134, %v137, %v140
    %v142 = vsel %vm131, nan, %v141
    %143 = vst [vmem:[#allocation2] sm:$0xf] %v142
    // Predicated region
    $region6: #{tpu_custom_call.1} parent=1 // pred_check
      _
    $region7: #{tpu_custom_call.1} parent=1 // pred_check_branch
      %145 = sbr.rel (0) target = $region9
    $region8: #{tpu_custom_call.1} parent=1 // pred_region
      %s147 = ssub.s32 64, 64
      %148 = vsyncadd [#allocation3], %s147
      %s150 = sshll.u32 [#allocation2], 4
      %s151 = int_to_ptr.vmem [resolvable:$true] %s150
      %153 = dma.vmem_to_hbm [thread:$0]  %s151, 64, %s1, [#allocation3]
    $region9: #{tpu_custom_call.1} parent=1 // pred_fallthru
      _
    // Predicated region
    $region10: #{tpu_custom_call.1} parent=1 // pred_check
      _
    $region11: #{tpu_custom_call.1} parent=1 // pred_check_branch
      %155 = sbr.rel (0) target = $region13
    $region12: #{tpu_custom_call.1} parent=1 // pred_region
      %156 = dma.done [#allocation3], 64
    $region13: #{tpu_custom_call.1} parent=1 // pred_fallthru
      _
    %157 = vsyncpa [#allocation3], 1

</llo_original>
